<compile_context>
chip_gen: v5e
topology: v5e:2x2
jax: 0.10.0
libtpu: 0.0.40
codegen_flags: <defaults>
</compile_context>

<pallas_src>
import functools

import jax
import jax.numpy as jnp
from jax.experimental import pallas as pl
from jax.experimental.pallas import tpu as pltpu


def _round_up(x, m):
    return ((x + m - 1) // m) * m


def _pick_tile(n_padded):
    # Largest of (512, 256, 128) dividing the padded node count.  512x512 bf16
    # A tiles are ~0.5 MiB/buffer: safe for v7x's 64 MiB VMEM with headroom.
    for t in (512, 256, 128):
        if n_padded % t == 0:
            return t
    return n_padded


# -----------------------------------------------------------------------------
# Kernel: one SAGEConv layer (+ optional LayerNorm, ReLU), tiled over (M, K).
# -----------------------------------------------------------------------------
def _sage_layer_kernel(a_ref, xk_ref, xi_ref, wl_ref, wr_ref, bl_ref, g_ref,
                       b_ref, o_ref, acc_ref, *, apply_norm, apply_relu, eps,
                       inv_c_out):
    k = pl.program_id(1)

    @pl.when(k == 0)
    def _init():
        acc_ref[...] = jnp.zeros_like(acc_ref)

    # Neighbor sum-aggregation: bf16 MXU matmul, f32 accumulation.
    acc_ref[...] += jnp.dot(a_ref[...], xk_ref[...],
                            preferred_element_type=jnp.float32)

    @pl.when(k == pl.num_programs(1) - 1)
    def _finalize():
        agg = acc_ref[...]                                   # (TM, Cin_p) f32
        x_self = xi_ref[...].astype(jnp.float32)             # (TM, Cin_p)
        h = jnp.dot(agg, wl_ref[...], preferred_element_type=jnp.float32)
        h = h + jnp.dot(x_self, wr_ref[...], preferred_element_type=jnp.float32)
        h = h + bl_ref[...]
        if apply_norm:
            # Padded channels of h are exactly 0, so a one-pass mean / E[h^2]
            # with the *real* channel count is exact.
            mean = jnp.sum(h, axis=-1, keepdims=True) * inv_c_out
            ex2 = jnp.sum(h * h, axis=-1, keepdims=True) * inv_c_out
            var = ex2 - mean * mean
            h = (h - mean) * jax.lax.rsqrt(var + eps)
            h = h * g_ref[...] + b_ref[...]
        if apply_relu:
            h = jnp.maximum(h, 0.0)
        o_ref[...] = h.astype(o_ref.dtype)


def sage_layer(a_p, x_p, w_l, w_r, b_l, gamma, beta, *, apply_norm, apply_relu,
               c_out_real, tile_m, tile_k, out_dtype=jnp.float32, eps=1e-5):
    """One fused SAGEConv (+ optional LayerNorm, ReLU) layer on padded arrays."""
    n_p = a_p.shape[0]
    c_in_p = x_p.shape[1]
    c_out_p = w_l.shape[1]
    grid = (n_p // tile_m, n_p // tile_k)

    kernel = functools.partial(
        _sage_layer_kernel, apply_norm=apply_norm, apply_relu=apply_relu,
        eps=eps, inv_c_out=1.0 / float(c_out_real))

    return pl.pallas_call(
        kernel,
        grid=grid,
        in_specs=[
            pl.BlockSpec((tile_m, tile_k), lambda i, k: (i, k)),     # A tile
            pl.BlockSpec((tile_k, c_in_p), lambda i, k: (k, 0)),     # X (reduction)
            pl.BlockSpec((tile_m, c_in_p), lambda i, k: (i, 0)),     # X (self/root)
            pl.BlockSpec((c_in_p, c_out_p), lambda i, k: (0, 0)),    # W_l
            pl.BlockSpec((c_in_p, c_out_p), lambda i, k: (0, 0)),    # W_r
            pl.BlockSpec((1, c_out_p), lambda i, k: (0, 0)),         # b_l
            pl.BlockSpec((1, c_out_p), lambda i, k: (0, 0)),         # gamma
            pl.BlockSpec((1, c_out_p), lambda i, k: (0, 0)),         # beta
        ],
        out_specs=pl.BlockSpec((tile_m, c_out_p), lambda i, k: (i, 0)),
        out_shape=jax.ShapeDtypeStruct((n_p, c_out_p), out_dtype),
        scratch_shapes=[pltpu.VMEM((tile_m, c_in_p), jnp.float32)],
        compiler_params=pltpu.CompilerParams(
            dimension_semantics=("parallel", "arbitrary"),
            vmem_limit_bytes=32 * 1024 * 1024),
    )(a_p, x_p, x_p, w_l, w_r, b_l, gamma, beta)


# -----------------------------------------------------------------------------
# Parameter construction (deterministic; mirrors GraphSAGEEncoder.__init__,
# stored pre-padded to lane-dense multiples of 128).
# -----------------------------------------------------------------------------
def init_encoder_params(key, in_channels, hidden_channels, out_channels,
                        num_layers=2, norm='layernorm'):
    assert norm == 'layernorm'
    dims = [in_channels] + [hidden_channels] * (num_layers - 1) + [out_channels]
    params = {'convs': [], 'norms': []}
    for li in range(num_layers):
        cin, cout = dims[li], dims[li + 1]
        cin_p, cout_p = _round_up(cin, 128), _round_up(cout, 128)
        key, k1, k2 = jax.random.split(key, 3)
        scale = 1.0 / jnp.sqrt(jnp.float32(cin))
        w_l = jax.random.normal(k1, (cin, cout), jnp.float32) * scale
        w_r = jax.random.normal(k2, (cin, cout), jnp.float32) * scale
        params['convs'].append({
            'w_l': jnp.pad(w_l, ((0, cin_p - cin), (0, cout_p - cout))),
            'w_r': jnp.pad(w_r, ((0, cin_p - cin), (0, cout_p - cout))),
            'b_l': jnp.zeros((1, cout_p), jnp.float32),
            'c_out': cout,
        })
    # Norms only exist for the num_layers-2 middle layers, as in the module.
    hp = _round_up(hidden_channels, 128)
    for _ in range(num_layers - 2):
        gamma = jnp.pad(jnp.ones((1, hidden_channels), jnp.float32),
                        ((0, 0), (0, hp - hidden_channels)))
        params['norms'].append({
            'gamma': gamma,
            'beta': jnp.zeros((1, hp), jnp.float32),
        })
    return params


def graphsage_encoder_forward(params, x, adj):
    """Matches GraphSAGEEncoder.forward in eval mode (dropout = identity)."""
    n, c_in = x.shape
    n_p = _round_up(n, 128)
    tile = _pick_tile(n_p)

    # bf16 adjacency: edge multiplicities are small integers, exact in bf16.
    a_p = jnp.pad(adj, ((0, n_p - n), (0, n_p - n))).astype(jnp.bfloat16)

    c_in_p = _round_up(c_in, 128)
    h = jnp.pad(x, ((0, n_p - n), (0, c_in_p - c_in))).astype(jnp.bfloat16)

    num_layers = len(params['convs'])
    num_norms = len(params['norms'])

    for i in range(num_layers - 1):
        conv = params['convs'][i]
        c_out_p = conv['w_l'].shape[1]
        if i < num_norms:
            nrm = params['norms'][i]
            gamma, beta, apply_norm = nrm['gamma'], nrm['beta'], True
        else:
            gamma = jnp.ones((1, c_out_p), jnp.float32)
            beta = jnp.zeros((1, c_out_p), jnp.float32)
            apply_norm = False
        h = sage_layer(a_p, h, conv['w_l'], conv['w_r'], conv['b_l'],
                       gamma, beta, apply_norm=apply_norm, apply_relu=True,
                       c_out_real=conv['c_out'], tile_m=tile, tile_k=tile,
                       out_dtype=jnp.bfloat16)
        # F.dropout(..., training=False) -> identity

    conv = params['convs'][-1]
    c_out_p = conv['w_l'].shape[1]
    out_p = sage_layer(a_p, h, conv['w_l'], conv['w_r'], conv['b_l'],
                       jnp.ones((1, c_out_p), jnp.float32),
                       jnp.zeros((1, c_out_p), jnp.float32),
                       apply_norm=False, apply_relu=False,
                       c_out_real=conv['c_out'], tile_m=tile, tile_k=tile,
                       out_dtype=jnp.float32)
    return out_p[:n, :conv['c_out']]


def edge_index_to_dense_adj(edge_index, num_nodes):
    # A[dst, src] = number of edges src -> dst (sum-aggregation multiplicity).
    src, dst = edge_index[0], edge_index[1]
    adj = jnp.zeros((num_nodes, num_nodes), jnp.float32)
    return adj.at[dst, src].add(1.0)


if __name__ == "__main__":
    # Small deterministic problem: 32 nodes, 16 input features,
    # hidden=32, out=64, num_layers=3 (exercises one LayerNorm).
    N, E = 32, 128
    IN_C, HID_C, OUT_C, NUM_LAYERS = 16, 32, 64, 3

    key = jax.random.PRNGKey(0)
    kx, ksrc, kdst, kparams = jax.random.split(key, 4)

    x = jax.random.normal(kx, (N, IN_C), jnp.float32)
    src = jax.random.randint(ksrc, (E,), 0, N)
    dst = jax.random.randint(kdst, (E,), 0, N)
    edge_index = jnp.stack([src, dst], axis=0)          # [2, E], COO

    adj = edge_index_to_dense_adj(edge_index, N)        # glue, plain JAX
    params = init_encoder_params(kparams, IN_C, HID_C, OUT_C,
                                 num_layers=NUM_LAYERS, norm='layernorm')

    out = graphsage_encoder_forward(params, x, adj)
    out = jax.block_until_ready(out)
    assert out.shape == (N, OUT_C)
    assert bool(jnp.all(jnp.isfinite(out)))
    print("KERNEL_OK")
</pallas_src>

<mosaic_0001>
module attributes {stable_mosaic.version = 11 : i64} {
  func.func @_sage_layer_kernel(%arg0: i32, %arg1: i32, %arg2: memref<128x128xbf16, #tpu.memory_space<vmem>>, %arg3: memref<128x128xbf16, #tpu.memory_space<vmem>>, %arg4: memref<128x128xbf16, #tpu.memory_space<vmem>>, %arg5: memref<128x128xf32, #tpu.memory_space<vmem>>, %arg6: memref<128x128xf32, #tpu.memory_space<vmem>>, %arg7: memref<1x128xf32, #tpu.memory_space<vmem>>, %arg8: memref<1x128xf32, #tpu.memory_space<vmem>>, %arg9: memref<1x128xf32, #tpu.memory_space<vmem>>, %arg10: memref<128x128xbf16, #tpu.memory_space<vmem>>, %arg11: memref<128x128xf32, #tpu.memory_space<vmem>>) attributes {dimension_semantics = [#tpu.dimension_semantics<parallel>, #tpu.dimension_semantics<arbitrary>], iteration_bounds = array<i64: 1, 1>, scalar_prefetch = 0 : i64, scratch_operands = 1 : i64, tpu.core_type = #tpu.core_type<tc>, window_params = [{transform_indices = @transform_0, window_bounds = array<i64: 128, 128>}, {transform_indices = @transform_1, window_bounds = array<i64: 128, 128>}, {transform_indices = @transform_2, window_bounds = array<i64: 128, 128>}, {pipeline_mode = #tpu.pipeline_mode<synchronous>, transform_indices = @transform_3, window_bounds = array<i64: 128, 128>}, {pipeline_mode = #tpu.pipeline_mode<synchronous>, transform_indices = @transform_4, window_bounds = array<i64: 128, 128>}, {pipeline_mode = #tpu.pipeline_mode<synchronous>, transform_indices = @transform_5, window_bounds = array<i64: 1, 128>}, {pipeline_mode = #tpu.pipeline_mode<synchronous>, transform_indices = @transform_6, window_bounds = array<i64: 1, 128>}, {pipeline_mode = #tpu.pipeline_mode<synchronous>, transform_indices = @transform_7, window_bounds = array<i64: 1, 128>}, {transform_indices = @transform_8, window_bounds = array<i64: 128, 128>}]} {
    %c0_i32 = arith.constant 0 : i32
    %0 = arith.cmpi eq, %arg1, %c0_i32 : i32
    %1 = arith.extui %0 : i1 to i32
    %c0_i32_0 = arith.constant 0 : i32
    %2 = arith.cmpi ne, %1, %c0_i32_0 : i32
    scf.if %2 {
      %cst_10 = arith.constant 0.000000e+00 : f32
      %12 = vector.broadcast %cst_10 : f32 to vector<128x128xf32>
      %c0_11 = arith.constant 0 : index
      %c0_12 = arith.constant 0 : index
      %13 = vector.load %arg11[%c0_11, %c0_12] : memref<128x128xf32, #tpu.memory_space<vmem>>, vector<128x128xf32>
      tpu.vector_store %arg11[%c0_11, %c0_12], %12 {strides = array<i32>} : memref<128x128xf32, #tpu.memory_space<vmem>>, vector<128x128xf32>,
    } else {
    }
    %c0 = arith.constant 0 : index
    %c0_1 = arith.constant 0 : index
    %3 = vector.load %arg11[%c0, %c0_1] : memref<128x128xf32, #tpu.memory_space<vmem>>, vector<128x128xf32>
    %c0_2 = arith.constant 0 : index
    %c0_3 = arith.constant 0 : index
    %4 = vector.load %arg2[%c0_2, %c0_3] : memref<128x128xbf16, #tpu.memory_space<vmem>>, vector<128x128xbf16>
    %c0_4 = arith.constant 0 : index
    %c0_5 = arith.constant 0 : index
    %5 = vector.load %arg3[%c0_4, %c0_5] : memref<128x128xbf16, #tpu.memory_space<vmem>>, vector<128x128xbf16>
    %cst = arith.constant dense<0.000000e+00> : vector<128x128xf32>
    %6 = tpu.matmul %4, %5, %cst {dimension_numbers = #tpu.dot_dimension_numbers<[1], [0], [0], [1], [0, 0, 1, 1], [], []>} : vector<128x128xbf16>, vector<128x128xbf16>, vector<128x128xf32> -> vector<128x128xf32>
    %7 = arith.addf %3, %6 : vector<128x128xf32>
    %c0_6 = arith.constant 0 : index
    %c0_7 = arith.constant 0 : index
    %8 = vector.load %arg11[%c0_6, %c0_7] : memref<128x128xf32, #tpu.memory_space<vmem>>, vector<128x128xf32>
    tpu.vector_store %arg11[%c0_6, %c0_7], %7 {strides = array<i32>} : memref<128x128xf32, #tpu.memory_space<vmem>>, vector<128x128xf32>,
    %c0_i32_8 = arith.constant 0 : i32
    %9 = arith.cmpi eq, %arg1, %c0_i32_8 : i32
    %10 = arith.extui %9 : i1 to i32
    %c0_i32_9 = arith.constant 0 : i32
    %11 = arith.cmpi ne, %10, %c0_i32_9 : i32
    scf.if %11 {
      %c0_10 = arith.constant 0 : index
      %c0_11 = arith.constant 0 : index
      %12 = vector.load %arg11[%c0_10, %c0_11] : memref<128x128xf32, #tpu.memory_space<vmem>>, vector<128x128xf32>
      %c0_12 = arith.constant 0 : index
      %c0_13 = arith.constant 0 : index
      %13 = vector.load %arg4[%c0_12, %c0_13] : memref<128x128xbf16, #tpu.memory_space<vmem>>, vector<128x128xbf16>
      %14 = arith.extf %13 : vector<128x128xbf16> to vector<128x128xf32>
      %c0_14 = arith.constant 0 : index
      %c0_15 = arith.constant 0 : index
      %15 = vector.load %arg5[%c0_14, %c0_15] : memref<128x128xf32, #tpu.memory_space<vmem>>, vector<128x128xf32>
      %cst_16 = arith.constant dense<0.000000e+00> : vector<128x128xf32>
      %16 = tpu.matmul %12, %15, %cst_16 {dimension_numbers = #tpu.dot_dimension_numbers<[1], [0], [0], [1], [0, 0, 1, 1], [], []>} : vector<128x128xf32>, vector<128x128xf32>, vector<128x128xf32> -> vector<128x128xf32>
      %c0_17 = arith.constant 0 : index
      %c0_18 = arith.constant 0 : index
      %17 = vector.load %arg6[%c0_17, %c0_18] : memref<128x128xf32, #tpu.memory_space<vmem>>, vector<128x128xf32>
      %cst_19 = arith.constant dense<0.000000e+00> : vector<128x128xf32>
      %18 = tpu.matmul %14, %17, %cst_19 {dimension_numbers = #tpu.dot_dimension_numbers<[1], [0], [0], [1], [0, 0, 1, 1], [], []>} : vector<128x128xf32>, vector<128x128xf32>, vector<128x128xf32> -> vector<128x128xf32>
      %19 = arith.addf %16, %18 : vector<128x128xf32>
      %c0_20 = arith.constant 0 : index
      %c0_21 = arith.constant 0 : index
      %20 = vector.load %arg7[%c0_20, %c0_21] : memref<1x128xf32, #tpu.memory_space<vmem>>, vector<1x128xf32>
      %21 = vector.broadcast %20 : vector<1x128xf32> to vector<128x128xf32>
      %22 = arith.addf %19, %21 : vector<128x128xf32>
      %cst_22 = arith.constant dense<0.000000e+00> : vector<128xf32>
      %23 = vector.multi_reduction <add>, %22, %cst_22 [1] : vector<128x128xf32> to vector<128xf32>
      %24 = vector.shape_cast %23 : vector<128xf32> to vector<128x1xf32>
      %cst_23 = arith.constant 3.125000e-02 : f32
      %25 = vector.broadcast %cst_23 : f32 to vector<128x1xf32>
      %26 = arith.mulf %24, %25 : vector<128x1xf32>
      %27 = arith.mulf %22, %22 : vector<128x128xf32>
      %cst_24 = arith.constant dense<0.000000e+00> : vector<128xf32>
      %28 = vector.multi_reduction <add>, %27, %cst_24 [1] : vector<128x128xf32> to vector<128xf32>
      %29 = vector.shape_cast %28 : vector<128xf32> to vector<128x1xf32>
      %cst_25 = arith.constant 3.125000e-02 : f32
      %30 = vector.broadcast %cst_25 : f32 to vector<128x1xf32>
      %31 = arith.mulf %29, %30 : vector<128x1xf32>
      %32 = arith.mulf %26, %26 : vector<128x1xf32>
      %33 = arith.subf %31, %32 : vector<128x1xf32>
      %34 = vector.broadcast %26 : vector<128x1xf32> to vector<128x128xf32>
      %35 = arith.subf %22, %34 : vector<128x128xf32>
      %cst_26 = arith.constant 9.99999974E-6 : f32
      %36 = vector.broadcast %cst_26 : f32 to vector<128x1xf32>
      %37 = arith.addf %33, %36 : vector<128x1xf32>
      %38 = math.rsqrt %37 : vector<128x1xf32>
      %39 = vector.broadcast %38 : vector<128x1xf32> to vector<128x128xf32>
      %40 = arith.mulf %35, %39 : vector<128x128xf32>
      %c0_27 = arith.constant 0 : index
      %c0_28 = arith.constant 0 : index
      %41 = vector.load %arg8[%c0_27, %c0_28] : memref<1x128xf32, #tpu.memory_space<vmem>>, vector<1x128xf32>
      %42 = vector.broadcast %41 : vector<1x128xf32> to vector<128x128xf32>
      %43 = arith.mulf %40, %42 : vector<128x128xf32>
      %c0_29 = arith.constant 0 : index
      %c0_30 = arith.constant 0 : index
      %44 = vector.load %arg9[%c0_29, %c0_30] : memref<1x128xf32, #tpu.memory_space<vmem>>, vector<1x128xf32>
      %45 = vector.broadcast %44 : vector<1x128xf32> to vector<128x128xf32>
      %46 = arith.addf %43, %45 : vector<128x128xf32>
      %cst_31 = arith.constant 0.000000e+00 : f32
      %47 = vector.broadcast %cst_31 : f32 to vector<128x128xf32>
      %48 = arith.maximumf %46, %47 : vector<128x128xf32>
      %49 = arith.truncf %48 : vector<128x128xf32> to vector<128x128xbf16>
      %c0_32 = arith.constant 0 : index
      %c0_33 = arith.constant 0 : index
      %50 = vector.load %arg10[%c0_32, %c0_33] : memref<128x128xbf16, #tpu.memory_space<vmem>>, vector<128x128xbf16>
      tpu.vector_store %arg10[%c0_32, %c0_33], %49 {strides = array<i32>} : memref<128x128xbf16, #tpu.memory_space<vmem>>, vector<128x128xbf16>,
    } else {
    }
    return
  }
  func.func @transform_0(%arg0: i32, %arg1: i32) -> (i32, i32) {
    %c0_i32 = arith.constant 0 : i32
    return %arg0, %arg1 : i32, i32
  }
  func.func @transform_1(%arg0: i32, %arg1: i32) -> (i32, i32) {
    %c0_i32 = arith.constant 0 : i32
    %c0_i32_0 = arith.constant 0 : i32
    return %arg1, %c0_i32 : i32, i32
  }
  func.func @transform_2(%arg0: i32, %arg1: i32) -> (i32, i32) {
    %c0_i32 = arith.constant 0 : i32
    %c0_i32_0 = arith.constant 0 : i32
    return %arg0, %c0_i32 : i32, i32
  }
  func.func @transform_3(%arg0: i32, %arg1: i32) -> (i32, i32) {
    %c0_i32 = arith.constant 0 : i32
    %c0_i32_0 = arith.constant 0 : i32
    %c0_i32_1 = arith.constant 0 : i32
    return %c0_i32, %c0_i32_0 : i32, i32
  }
  func.func @transform_4(%arg0: i32, %arg1: i32) -> (i32, i32) {
    %c0_i32 = arith.constant 0 : i32
    %c0_i32_0 = arith.constant 0 : i32
    %c0_i32_1 = arith.constant 0 : i32
    return %c0_i32, %c0_i32_0 : i32, i32
  }
  func.func @transform_5(%arg0: i32, %arg1: i32) -> (i32, i32) {
    %c0_i32 = arith.constant 0 : i32
    %c0_i32_0 = arith.constant 0 : i32
    %c0_i32_1 = arith.constant 0 : i32
    return %c0_i32, %c0_i32_0 : i32, i32
  }
  func.func @transform_6(%arg0: i32, %arg1: i32) -> (i32, i32) {
    %c0_i32 = arith.constant 0 : i32
    %c0_i32_0 = arith.constant 0 : i32
    %c0_i32_1 = arith.constant 0 : i32
    return %c0_i32, %c0_i32_0 : i32, i32
  }
  func.func @transform_7(%arg0: i32, %arg1: i32) -> (i32, i32) {
    %c0_i32 = arith.constant 0 : i32
    %c0_i32_0 = arith.constant 0 : i32
    %c0_i32_1 = arith.constant 0 : i32
    return %c0_i32, %c0_i32_0 : i32, i32
  }
  func.func @transform_8(%arg0: i32, %arg1: i32) -> (i32, i32) {
    %c0_i32 = arith.constant 0 : i32
    %c0_i32_0 = arith.constant 0 : i32
    return %arg0, %c0_i32 : i32, i32
  }
}

</mosaic_0001>

<llo_original>
// kernel: tpu_custom_call.1
$region0: #{tpu_custom_call.1}
  #allocation0 [shape = 'u32[]', space=smem, size = 0x4, offset = 0x4, fixed_abs, tag = 'smem constant byte address 0x4 - core index']
  #allocation1 [shape = 'u32[72,128]{1,0:T(1,128)}', space=vmem, size = 0x9000, scoped, tag = 'internal scratch']
  #allocation2 [shape = 'f32[128,128]{1,0:T(8,128)}', space=vmem, size = 0x10000, scoped, tag = 'scratch operand']
  %s0 = inlined_call_operand.hbm [shape: bf16[128,128], index: 0, kind: input, shape index: {}]
  %s1 = inlined_call_operand.hbm [shape: bf16[128,128], index: 1, kind: input, shape index: {}]
  %s2 = inlined_call_operand.hbm [shape: bf16[128,128], index: 2, kind: input, shape index: {}]
  %s3 = inlined_call_operand.hbm [shape: f32[128,128], index: 3, kind: input, shape index: {}]
  %s4 = inlined_call_operand.hbm [shape: f32[128,128], index: 4, kind: input, shape index: {}]
  %s5 = inlined_call_operand.vmem [shape: f32[1,128], index: 5, kind: input, shape index: {}]
  %s6 = inlined_call_operand.vmem [shape: f32[1,128], index: 6, kind: input, shape index: {}]
  %s7 = inlined_call_operand.vmem [shape: f32[1,128], index: 7, kind: input, shape index: {}]
  %s8 = inlined_call_operand.hbm [shape: bf16[128,128], index: 8, kind: output, shape index: {}]
  %s9 = sld [smem:[#allocation0]]
  $region70: #{tpu_custom_call.1} parent=0
    _
  %s11 = ssub.s32 1, %s9
  %s12 = scalar_select 0, %s11, %s9
  $region1: #{tpu_custom_call.1} parent=0
    #allocation3 [shape = 'u8[32768]{0}', space=vmem, size = 0x8000, scoped, tag = 'input window, operand 0, single buffered']
    #allocation4 [shape = 's32[1]{0}', space=sflag, size = 0x4, scoped, tag = 'scoped memory for tpu_custom_call.1']
    #allocation5 [shape = 's32[1]{0}', space=sflag, size = 0x4, scoped, tag = 'scoped memory for tpu_custom_call.1']
    #allocation6 [shape = 'u8[32768]{0}', space=vmem, size = 0x8000, scoped, tag = 'input window, operand 1, single buffered']
    #allocation7 [shape = 's32[1]{0}', space=sflag, size = 0x4, scoped, tag = 'scoped memory for tpu_custom_call.1']
    #allocation8 [shape = 'u8[32768]{0}', space=vmem, size = 0x8000, scoped, tag = 'input window, operand 2, single buffered']
    #allocation9 [shape = 'u8[65536]{0}', space=vmem, size = 0x10000, scoped, tag = 'input window, operand 3, single buffered']
    #allocation10 [shape = 's32[1]{0}', space=sflag, size = 0x4, scoped, tag = 'scoped memory for tpu_custom_call.1']
    #allocation11 [shape = 'u8[65536]{0}', space=vmem, size = 0x10000, scoped, tag = 'input window, operand 4, single buffered']
    #allocation12 [shape = 'u8[32768]{0}', space=vmem, size = 0x8000, scoped, tag = 'output window, operand 0, single buffered']
    %13 = vsyncpa [#allocation4], 0
    %14 = vsyncpa [#allocation7], 0
    %15 = vsyncpa [#allocation10], 0
    %16 = vsyncpa [#allocation5], 0
    // Predicated region
    $region2: #{tpu_custom_call.1} parent=1 // pred_check
      _
    $region3: #{tpu_custom_call.1} parent=1 // pred_check_branch
      %18 = sbr.rel (0) target = $region5
    $region4: #{tpu_custom_call.1} parent=1 // pred_region
      %20 = vsyncadd [#allocation4], 0
      %s21 = sshll.u32 %s0, 4
      %s22 = int_to_ptr.hbm [resolvable:$true] %s21
      %s23 = sshll.u32 [#allocation3], 4
      %s24 = int_to_ptr.vmem [resolvable:$true] %s23
      %29 = dma.hbm_to_vmem [thread:$0]  %s22, 1024, %s24, [#allocation4], 64, 64, 4
    $region5: #{tpu_custom_call.1} parent=1 // pred_fallthru
      _
    // Predicated region
    $region6: #{tpu_custom_call.1} parent=1 // pred_check
      _
    $region7: #{tpu_custom_call.1} parent=1 // pred_check_branch
      %31 = sbr.rel (0) target = $region9
    $region8: #{tpu_custom_call.1} parent=1 // pred_region
      %33 = vsyncadd [#allocation7], 0
      %s34 = sshll.u32 %s1, 4
      %s35 = int_to_ptr.hbm [resolvable:$true] %s34
      %s36 = sshll.u32 [#allocation6], 4
      %s37 = int_to_ptr.vmem [resolvable:$true] %s36
      %42 = dma.hbm_to_vmem [thread:$0]  %s35, 1024, %s37, [#allocation7], 64, 64, 4
    $region9: #{tpu_custom_call.1} parent=1 // pred_fallthru
      _
    // Predicated region
    $region10: #{tpu_custom_call.1} parent=1 // pred_check
      _
    $region11: #{tpu_custom_call.1} parent=1 // pred_check_branch
      %44 = sbr.rel (0) target = $region13
    $region12: #{tpu_custom_call.1} parent=1 // pred_region
      %46 = vsyncadd [#allocation7], 0
      %s47 = sshll.u32 %s2, 4
      %s48 = int_to_ptr.hbm [resolvable:$true] %s47
      %s49 = sshll.u32 [#allocation8], 4
      %s50 = int_to_ptr.vmem [resolvable:$true] %s49
      %55 = dma.hbm_to_vmem [thread:$0]  %s48, 1024, %s50, [#allocation7], 64, 64, 4
    $region13: #{tpu_custom_call.1} parent=1 // pred_fallthru
      _
    // Predicated region
    $region14: #{tpu_custom_call.1} parent=1 // pred_check
      _
    $region15: #{tpu_custom_call.1} parent=1 // pred_check_branch
      %57 = sbr.rel (0) target = $region17
    $region16: #{tpu_custom_call.1} parent=1 // pred_region
      %59 = vsyncadd [#allocation10], 0
      %s60 = sshll.u32 %s3, 4
      %s61 = int_to_ptr.hbm [resolvable:$true] %s60
      %s62 = sshll.u32 [#allocation9], 4
      %s63 = int_to_ptr.vmem [resolvable:$true] %s62
      %68 = dma.hbm_to_vmem [thread:$0]  %s61, 2048, %s63, [#allocation10], 128, 128, 8
    $region17: #{tpu_custom_call.1} parent=1 // pred_fallthru
      _
    // Predicated region
    $region18: #{tpu_custom_call.1} parent=1 // pred_check
      _
    $region19: #{tpu_custom_call.1} parent=1 // pred_check_branch
      %70 = sbr.rel (0) target = $region21
    $region20: #{tpu_custom_call.1} parent=1 // pred_region
      %72 = vsyncadd [#allocation10], 0
      %s73 = sshll.u32 %s4, 4
      %s74 = int_to_ptr.hbm [resolvable:$true] %s73
      %s75 = sshll.u32 [#allocation11], 4
      %s76 = int_to_ptr.vmem [resolvable:$true] %s75
      %81 = dma.hbm_to_vmem [thread:$0]  %s74, 2048, %s76, [#allocation10], 128, 128, 8
    $region21: #{tpu_custom_call.1} parent=1 // pred_fallthru
      _
    // Predicated region
    $region22: #{tpu_custom_call.1} parent=1 // pred_check
      _
    $region23: #{tpu_custom_call.1} parent=1 // pred_check_branch
      %83 = sbr.rel (0) target = $region25
    $region24: #{tpu_custom_call.1} parent=1 // pred_region
      _
    $region25: #{tpu_custom_call.1} parent=1 // pred_fallthru
      _
    // Predicated region
    $region26: #{tpu_custom_call.1} parent=1 // pred_check
      _
    $region27: #{tpu_custom_call.1} parent=1 // pred_check_branch
      %85 = sbr.rel (0) target = $region29
    $region28: #{tpu_custom_call.1} parent=1 // pred_region
      _
    $region29: #{tpu_custom_call.1} parent=1 // pred_fallthru
      _
    // Predicated region
    $region30: #{tpu_custom_call.1} parent=1 // pred_check
      _
    $region31: #{tpu_custom_call.1} parent=1 // pred_check_branch
      %87 = sbr.rel (0) target = $region33
    $region32: #{tpu_custom_call.1} parent=1 // pred_region
      _
    $region33: #{tpu_custom_call.1} parent=1 // pred_fallthru
      _
    // Predicated region
    $region34: #{tpu_custom_call.1} parent=1 // pred_check
      _
    $region35: #{tpu_custom_call.1} parent=1 // pred_check_branch
      %89 = sbr.rel (0) target = $region37
    $region36: #{tpu_custom_call.1} parent=1 // pred_region
      %91 = dma.done [#allocation4], 1024
    $region37: #{tpu_custom_call.1} parent=1 // pred_fallthru
      _
    // Predicated region
    $region38: #{tpu_custom_call.1} parent=1 // pred_check
      _
    $region39: #{tpu_custom_call.1} parent=1 // pred_check_branch
      %93 = sbr.rel (0) target = $region41
    $region40: #{tpu_custom_call.1} parent=1 // pred_region
      %95 = dma.done [#allocation7], 1024
    $region41: #{tpu_custom_call.1} parent=1 // pred_fallthru
      _
    // Predicated region
    $region42: #{tpu_custom_call.1} parent=1 // pred_check
      _
    $region43: #{tpu_custom_call.1} parent=1 // pred_check_branch
      %97 = sbr.rel (0) target = $region45
    $region44: #{tpu_custom_call.1} parent=1 // pred_region
      %99 = dma.done [#allocation7], 1024
    $region45: #{tpu_custom_call.1} parent=1 // pred_fallthru
      _
    // Predicated region
    $region46: #{tpu_custom_call.1} parent=1 // pred_check
      _
    $region47: #{tpu_custom_call.1} parent=1 // pred_check_branch
      %101 = sbr.rel (0) target = $region49
    $region48: #{tpu_custom_call.1} parent=1 // pred_region
      %103 = dma.done [#allocation10], 2048
    $region49: #{tpu_custom_call.1} parent=1 // pred_fallthru
      _
    // Predicated region
    $region50: #{tpu_custom_call.1} parent=1 // pred_check
      _
    $region51: #{tpu_custom_call.1} parent=1 // pred_check_branch
      %105 = sbr.rel (0) target = $region53
    $region52: #{tpu_custom_call.1} parent=1 // pred_region
      %107 = dma.done [#allocation10], 2048
    $region53: #{tpu_custom_call.1} parent=1 // pred_fallthru
      _
    %p108 = scmp.eq.s32.totalorder 0, 0
    // Predicated region
    $region54: #{tpu_custom_call.1} parent=1 // pred_check
      %p109 = pneg %p108
    $region55: #{tpu_custom_call.1} parent=1 // pred_check_branch
      %111 = sbr.rel (%p109) target = $region57
    $region56: #{tpu_custom_call.1} parent=1 // pred_region
      %112 = vst [vmem:[#allocation2] sm:$0xff] 0.0
      %113 = vst [vmem:[#allocation2 + $0x8] sm:$0xff] 0.0
      %114 = vst [vmem:[#allocation2 + $0x10] sm:$0xff] 0.0
      %115 = vst [vmem:[#allocation2 + $0x18] sm:$0xff] 0.0
      %116 = vst [vmem:[#allocation2 + $0x20] sm:$0xff] 0.0
      %117 = vst [vmem:[#allocation2 + $0x28] sm:$0xff] 0.0
      %118 = vst [vmem:[#allocation2 + $0x30] sm:$0xff] 0.0
      %119 = vst [vmem:[#allocation2 + $0x38] sm:$0xff] 0.0
      %120 = vst [vmem:[#allocation2 + $0x40] sm:$0xff] 0.0
      %121 = vst [vmem:[#allocation2 + $0x48] sm:$0xff] 0.0
      %122 = vst [vmem:[#allocation2 + $0x50] sm:$0xff] 0.0
      %123 = vst [vmem:[#allocation2 + $0x58] sm:$0xff] 0.0
      %124 = vst [vmem:[#allocation2 + $0x60] sm:$0xff] 0.0
      %125 = vst [vmem:[#allocation2 + $0x68] sm:$0xff] 0.0
      %126 = vst [vmem:[#allocation2 + $0x70] sm:$0xff] 0.0
      %127 = vst [vmem:[#allocation2 + $0x78] sm:$0xff] 0.0
    $region57: #{tpu_custom_call.1} parent=1 // pred_fallthru
      _
    %v128 = vld [vmem:[#allocation2] sm:$0xff]
    %v129 = vld [vmem:[#allocation2 + $0x8] sm:$0xff]
    %v130 = vld [vmem:[#allocation2 + $0x10] sm:$0xff]
    %v131 = vld [vmem:[#allocation2 + $0x18] sm:$0xff]
    %v132 = vld [vmem:[#allocation2 + $0x20] sm:$0xff]
    %v133 = vld [vmem:[#allocation2 + $0x28] sm:$0xff]
    %v134 = vld [vmem:[#allocation2 + $0x30] sm:$0xff]
    %v135 = vld [vmem:[#allocation2 + $0x38] sm:$0xff]
    %v136 = vld [vmem:[#allocation2 + $0x40] sm:$0xff]
    %v137 = vld [vmem:[#allocation2 + $0x48] sm:$0xff]
    %v138 = vld [vmem:[#allocation2 + $0x50] sm:$0xff]
    %v139 = vld [vmem:[#allocation2 + $0x58] sm:$0xff]
    %v140 = vld [vmem:[#allocation2 + $0x60] sm:$0xff]
    %v141 = vld [vmem:[#allocation2 + $0x68] sm:$0xff]
    %v142 = vld [vmem:[#allocation2 + $0x70] sm:$0xff]
    %v143 = vld [vmem:[#allocation2 + $0x78] sm:$0xff]
    %v144 = vld [vmem:[#allocation3] sm:$0xf]
    %v145 = vld [vmem:[#allocation3 + $0x4] sm:$0xf]
    %v146 = vld [vmem:[#allocation3 + $0x8] sm:$0xf]
    %v147 = vld [vmem:[#allocation3 + $0xc] sm:$0xf]
    %v148 = vld [vmem:[#allocation3 + $0x10] sm:$0xf]
    %v149 = vld [vmem:[#allocation3 + $0x14] sm:$0xf]
    %v150 = vld [vmem:[#allocation3 + $0x18] sm:$0xf]
    %v151 = vld [vmem:[#allocation3 + $0x1c] sm:$0xf]
    %v152 = vld [vmem:[#allocation3 + $0x20] sm:$0xf]
    %v153 = vld [vmem:[#allocation3 + $0x24] sm:$0xf]
    %v154 = vld [vmem:[#allocation3 + $0x28] sm:$0xf]
    %v155 = vld [vmem:[#allocation3 + $0x2c] sm:$0xf]
    %v156 = vld [vmem:[#allocation3 + $0x30] sm:$0xf]
    %v157 = vld [vmem:[#allocation3 + $0x34] sm:$0xf]
    %v158 = vld [vmem:[#allocation3 + $0x38] sm:$0xf]
    %v159 = vld [vmem:[#allocation3 + $0x3c] sm:$0xf]
    %v160 = vld [vmem:[#allocation6] sm:$0xf]
    %v161 = vld [vmem:[#allocation6 + $0x4] sm:$0xf]
    %v162 = vld [vmem:[#allocation6 + $0x8] sm:$0xf]
    %v163 = vld [vmem:[#allocation6 + $0xc] sm:$0xf]
    %v164 = vld [vmem:[#allocation6 + $0x10] sm:$0xf]
    %v165 = vld [vmem:[#allocation6 + $0x14] sm:$0xf]
    %v166 = vld [vmem:[#allocation6 + $0x18] sm:$0xf]
    %v167 = vld [vmem:[#allocation6 + $0x1c] sm:$0xf]
    %v168 = vld [vmem:[#allocation6 + $0x20] sm:$0xf]
    %v169 = vld [vmem:[#allocation6 + $0x24] sm:$0xf]
    %v170 = vld [vmem:[#allocation6 + $0x28] sm:$0xf]
    %v171 = vld [vmem:[#allocation6 + $0x2c] sm:$0xf]
    %v172 = vld [vmem:[#allocation6 + $0x30] sm:$0xf]
    %v173 = vld [vmem:[#allocation6 + $0x34] sm:$0xf]
    %v174 = vld [vmem:[#allocation6 + $0x38] sm:$0xf]
    %v175 = vld [vmem:[#allocation6 + $0x3c] sm:$0xf]
    %v192 = vunpack.c.l.b16 %v144
    %v193 = vunpack.c.l.b16 %v145
    %v194 = vunpack.c.l.b16 %v146
    %v195 = vunpack.c.l.b16 %v147
    %v196 = vunpack.c.l.b16 %v148
    %v197 = vunpack.c.l.b16 %v149
    %v198 = vunpack.c.l.b16 %v150
    %v199 = vunpack.c.l.b16 %v151
    %v200 = vunpack.c.l.b16 %v152
    %v201 = vunpack.c.l.b16 %v153
    %v202 = vunpack.c.l.b16 %v154
    %v203 = vunpack.c.l.b16 %v155
    %v204 = vunpack.c.l.b16 %v156
    %v205 = vunpack.c.l.b16 %v157
    %v206 = vunpack.c.l.b16 %v158
    %v207 = vunpack.c.l.b16 %v159
    %v208 = vpack.c.b16 %v193, %v192
    %v209 = vpack.c.b16 %v195, %v194
    %v210 = vpack.c.b16 %v197, %v196
    %v211 = vpack.c.b16 %v199, %v198
    %v212 = vpack.c.b16 %v201, %v200
    %v213 = vpack.c.b16 %v203, %v202
    %v214 = vpack.c.b16 %v205, %v204
    %v215 = vpack.c.b16 %v207, %v206
    %v240 = vunpack.c.l.b16 %v160
    %v241 = vunpack.c.l.b16 %v161
    %v242 = vunpack.c.l.b16 %v162
    %v243 = vunpack.c.l.b16 %v163
    %v244 = vunpack.c.l.b16 %v164
    %v245 = vunpack.c.l.b16 %v165
    %v246 = vunpack.c.l.b16 %v166
    %v247 = vunpack.c.l.b16 %v167
    %v248 = vunpack.c.l.b16 %v168
    %v249 = vunpack.c.l.b16 %v169
    %v250 = vunpack.c.l.b16 %v170
    %v251 = vunpack.c.l.b16 %v171
    %v252 = vunpack.c.l.b16 %v172
    %v253 = vunpack.c.l.b16 %v173
    %v254 = vunpack.c.l.b16 %v174
    %v255 = vunpack.c.l.b16 %v175
    %v256 = vpack.c.b16 %v241, %v240
    %v257 = vpack.c.b16 %v243, %v242
    %v258 = vpack.c.b16 %v245, %v244
    %v259 = vpack.c.b16 %v247, %v246
    %v260 = vpack.c.b16 %v249, %v248
    %v261 = vpack.c.b16 %v251, %v250
    %v262 = vpack.c.b16 %v253, %v252
    %v263 = vpack.c.b16 %v255, %v254
    %272 = vmatpush.bf16.msra.mxu0 %v263
    %273 = vmatpush.bf16.msra.mxu0 %v262
    %274 = vmatpush.bf16.msra.mxu0 %v261
    %275 = vmatpush.bf16.msra.mxu0 %v260
    %276 = vmatpush.bf16.msra.mxu0 %v259
    %277 = vmatpush.bf16.msra.mxu0 %v258
    %278 = vmatpush.bf16.msra.mxu0 %v257
    %279 = vmatpush.bf16.msra.mxu0 %v256
    %280 = vmatmul.bf16.gmra.mxu0 %v208
    %v281 = vpop.f32.mrf.mxu0
    %v282 = vadd.f32 0.0, %v281
    %v283 = vpop.f32.mrf.mxu0
    %v284 = vadd.f32 0.0, %v283
    %285 = vmatmul.bf16.gmra.mxu0 %v209
    %v286 = vpop.f32.mrf.mxu0
    %v287 = vadd.f32 0.0, %v286
    %v288 = vpop.f32.mrf.mxu0
    %v289 = vadd.f32 0.0, %v288
    %290 = vmatmul.bf16.gmra.mxu0 %v210
    %v291 = vpop.f32.mrf.mxu0
    %v292 = vadd.f32 0.0, %v291
    %v293 = vpop.f32.mrf.mxu0
    %v294 = vadd.f32 0.0, %v293
    %295 = vmatmul.bf16.gmra.mxu0 %v211
    %v296 = vpop.f32.mrf.mxu0
    %v297 = vadd.f32 0.0, %v296
    %v298 = vpop.f32.mrf.mxu0
    %v299 = vadd.f32 0.0, %v298
    %300 = vmatmul.bf16.gmra.mxu0 %v212
    %v301 = vpop.f32.mrf.mxu0
    %v302 = vadd.f32 0.0, %v301
    %v303 = vpop.f32.mrf.mxu0
    %v304 = vadd.f32 0.0, %v303
    %305 = vmatmul.bf16.gmra.mxu0 %v213
    %v306 = vpop.f32.mrf.mxu0
    %v307 = vadd.f32 0.0, %v306
    %v308 = vpop.f32.mrf.mxu0
    %v309 = vadd.f32 0.0, %v308
    %310 = vmatmul.bf16.gmra.mxu0 %v214
    %v311 = vpop.f32.mrf.mxu0
    %v312 = vadd.f32 0.0, %v311
    %v313 = vpop.f32.mrf.mxu0
    %v314 = vadd.f32 0.0, %v313
    %315 = vmatmul.bf16.gmra.mxu0 %v215
    %v316 = vpop.f32.mrf.mxu0
    %v317 = vadd.f32 0.0, %v316
    %v318 = vpop.f32.mrf.mxu0
    %v319 = vadd.f32 0.0, %v318
    %320 = vdwg.mxu0
    %v321 = vadd.f32 %v128, %v282
    %v322 = vadd.f32 %v129, %v284
    %v323 = vadd.f32 %v130, %v287
    %v324 = vadd.f32 %v131, %v289
    %v325 = vadd.f32 %v132, %v292
    %v326 = vadd.f32 %v133, %v294
    %v327 = vadd.f32 %v134, %v297
    %v328 = vadd.f32 %v135, %v299
    %v329 = vadd.f32 %v136, %v302
    %v330 = vadd.f32 %v137, %v304
    %v331 = vadd.f32 %v138, %v307
    %v332 = vadd.f32 %v139, %v309
    %v333 = vadd.f32 %v140, %v312
    %v334 = vadd.f32 %v141, %v314
    %v335 = vadd.f32 %v142, %v317
    %v336 = vadd.f32 %v143, %v319
    %337 = vst [vmem:[#allocation2] sm:$0xff] %v321
    %338 = vst [vmem:[#allocation2 + $0x8] sm:$0xff] %v322
    %339 = vst [vmem:[#allocation2 + $0x10] sm:$0xff] %v323
    %340 = vst [vmem:[#allocation2 + $0x18] sm:$0xff] %v324
    %341 = vst [vmem:[#allocation2 + $0x20] sm:$0xff] %v325
    %342 = vst [vmem:[#allocation2 + $0x28] sm:$0xff] %v326
    %343 = vst [vmem:[#allocation2 + $0x30] sm:$0xff] %v327
    %344 = vst [vmem:[#allocation2 + $0x38] sm:$0xff] %v328
    %345 = vst [vmem:[#allocation2 + $0x40] sm:$0xff] %v329
    %346 = vst [vmem:[#allocation2 + $0x48] sm:$0xff] %v330
    %347 = vst [vmem:[#allocation2 + $0x50] sm:$0xff] %v331
    %348 = vst [vmem:[#allocation2 + $0x58] sm:$0xff] %v332
    %349 = vst [vmem:[#allocation2 + $0x60] sm:$0xff] %v333
    %350 = vst [vmem:[#allocation2 + $0x68] sm:$0xff] %v334
    %351 = vst [vmem:[#allocation2 + $0x70] sm:$0xff] %v335
    %352 = vst [vmem:[#allocation2 + $0x78] sm:$0xff] %v336
    // Predicated region
    $region58: #{tpu_custom_call.1} parent=1 // pred_check
      %p353 = pneg %p108
    $region59: #{tpu_custom_call.1} parent=1 // pred_check_branch
      %355 = sbr.rel (%p353) target = $region61
    $region60: #{tpu_custom_call.1} parent=1 // pred_region
      %v356 = vld [vmem:[#allocation2] sm:$0xff]
      %v357 = vld [vmem:[#allocation2 + $0x8] sm:$0xff]
      %v358 = vld [vmem:[#allocation2 + $0x10] sm:$0xff]
      %v359 = vld [vmem:[#allocation2 + $0x18] sm:$0xff]
      %v360 = vld [vmem:[#allocation2 + $0x20] sm:$0xff]
      %v361 = vld [vmem:[#allocation2 + $0x28] sm:$0xff]
      %v362 = vld [vmem:[#allocation2 + $0x30] sm:$0xff]
      %v363 = vld [vmem:[#allocation2 + $0x38] sm:$0xff]
      %v364 = vld [vmem:[#allocation2 + $0x40] sm:$0xff]
      %v365 = vld [vmem:[#allocation2 + $0x48] sm:$0xff]
      %v366 = vld [vmem:[#allocation2 + $0x50] sm:$0xff]
      %v367 = vld [vmem:[#allocation2 + $0x58] sm:$0xff]
      %v368 = vld [vmem:[#allocation2 + $0x60] sm:$0xff]
      %v369 = vld [vmem:[#allocation2 + $0x68] sm:$0xff]
      %v370 = vld [vmem:[#allocation2 + $0x70] sm:$0xff]
      %v371 = vld [vmem:[#allocation2 + $0x78] sm:$0xff]
      %v372 = vld [vmem:[#allocation8] sm:$0xf]
      %v373 = vld [vmem:[#allocation8 + $0x4] sm:$0xf]
      %v374 = vld [vmem:[#allocation8 + $0x8] sm:$0xf]
      %v375 = vld [vmem:[#allocation8 + $0xc] sm:$0xf]
      %v376 = vld [vmem:[#allocation8 + $0x10] sm:$0xf]
      %v377 = vld [vmem:[#allocation8 + $0x14] sm:$0xf]
      %v378 = vld [vmem:[#allocation8 + $0x18] sm:$0xf]
      %v379 = vld [vmem:[#allocation8 + $0x1c] sm:$0xf]
      %v380 = vld [vmem:[#allocation8 + $0x20] sm:$0xf]
      %v381 = vld [vmem:[#allocation8 + $0x24] sm:$0xf]
      %v382 = vld [vmem:[#allocation8 + $0x28] sm:$0xf]
      %v383 = vld [vmem:[#allocation8 + $0x2c] sm:$0xf]
      %v384 = vld [vmem:[#allocation8 + $0x30] sm:$0xf]
      %v385 = vld [vmem:[#allocation8 + $0x34] sm:$0xf]
      %v386 = vld [vmem:[#allocation8 + $0x38] sm:$0xf]
      %v387 = vld [vmem:[#allocation8 + $0x3c] sm:$0xf]
      %v388 = vunpack.c.l.bf16 %v372
      %v389 = vunpack.c.l.bf16 %v373
      %v390 = vunpack.c.l.bf16 %v374
      %v391 = vunpack.c.l.bf16 %v375
      %v392 = vunpack.c.l.bf16 %v376
      %v393 = vunpack.c.l.bf16 %v377
      %v394 = vunpack.c.l.bf16 %v378
      %v395 = vunpack.c.l.bf16 %v379
      %v396 = vunpack.c.l.bf16 %v380
      %v397 = vunpack.c.l.bf16 %v381
      %v398 = vunpack.c.l.bf16 %v382
      %v399 = vunpack.c.l.bf16 %v383
      %v400 = vunpack.c.l.bf16 %v384
      %v401 = vunpack.c.l.bf16 %v385
      %v402 = vunpack.c.l.bf16 %v386
      %v403 = vunpack.c.l.bf16 %v387
      %v404 = vld [vmem:[#allocation9] sm:$0xff]
      %v405 = vld [vmem:[#allocation9 + $0x8] sm:$0xff]
      %v406 = vld [vmem:[#allocation9 + $0x10] sm:$0xff]
      %v407 = vld [vmem:[#allocation9 + $0x18] sm:$0xff]
      %v408 = vld [vmem:[#allocation9 + $0x20] sm:$0xff]
      %v409 = vld [vmem:[#allocation9 + $0x28] sm:$0xff]
      %v410 = vld [vmem:[#allocation9 + $0x30] sm:$0xff]
      %v411 = vld [vmem:[#allocation9 + $0x38] sm:$0xff]
      %v412 = vld [vmem:[#allocation9 + $0x40] sm:$0xff]
      %v413 = vld [vmem:[#allocation9 + $0x48] sm:$0xff]
      %v414 = vld [vmem:[#allocation9 + $0x50] sm:$0xff]
      %v415 = vld [vmem:[#allocation9 + $0x58] sm:$0xff]
      %v416 = vld [vmem:[#allocation9 + $0x60] sm:$0xff]
      %v417 = vld [vmem:[#allocation9 + $0x68] sm:$0xff]
      %v418 = vld [vmem:[#allocation9 + $0x70] sm:$0xff]
      %v419 = vld [vmem:[#allocation9 + $0x78] sm:$0xff]
      %v420 = vld [vmem:[#allocation11] sm:$0xff]
      %v421 = vld [vmem:[#allocation11 + $0x8] sm:$0xff]
      %v422 = vld [vmem:[#allocation11 + $0x10] sm:$0xff]
      %v423 = vld [vmem:[#allocation11 + $0x18] sm:$0xff]
      %v424 = vld [vmem:[#allocation11 + $0x20] sm:$0xff]
      %v425 = vld [vmem:[#allocation11 + $0x28] sm:$0xff]
      %v426 = vld [vmem:[#allocation11 + $0x30] sm:$0xff]
      %v427 = vld [vmem:[#allocation11 + $0x38] sm:$0xff]
      %v428 = vld [vmem:[#allocation11 + $0x40] sm:$0xff]
      %v429 = vld [vmem:[#allocation11 + $0x48] sm:$0xff]
      %v430 = vld [vmem:[#allocation11 + $0x50] sm:$0xff]
      %v431 = vld [vmem:[#allocation11 + $0x58] sm:$0xff]
      %v432 = vld [vmem:[#allocation11 + $0x60] sm:$0xff]
      %v433 = vld [vmem:[#allocation11 + $0x68] sm:$0xff]
      %v434 = vld [vmem:[#allocation11 + $0x70] sm:$0xff]
      %v435 = vld [vmem:[#allocation11 + $0x78] sm:$0xff]
      %436 = vmatpush.msra.mxu0 %v435
      %437 = vmatpush.msra.mxu0 %v434
      %438 = vmatpush.msra.mxu0 %v433
      %439 = vmatpush.msra.mxu0 %v432
      %440 = vmatpush.msra.mxu0 %v431
      %441 = vmatpush.msra.mxu0 %v430
      %442 = vmatpush.msra.mxu0 %v429
      %443 = vmatpush.msra.mxu0 %v428
      %444 = vmatpush.msra.mxu0 %v427
      %445 = vmatpush.msra.mxu0 %v426
      %446 = vmatpush.msra.mxu0 %v425
      %447 = vmatpush.msra.mxu0 %v424
      %448 = vmatpush.msra.mxu0 %v423
      %449 = vmatpush.msra.mxu0 %v422
      %450 = vmatpush.msra.mxu0 %v421
      %451 = vmatpush.msra.mxu0 %v420
      %452 = vmatmul.f32.gmra.mxu0 %v388
      %v453 = vpop.f32.mrf.mxu0
      %v454 = vadd.f32 0.0, %v453
      %455 = vmatmul.f32.gmra.mxu0 %v389
      %v456 = vpop.f32.mrf.mxu0
      %v457 = vadd.f32 0.0, %v456
      %458 = vmatmul.f32.gmra.mxu0 %v390
      %v459 = vpop.f32.mrf.mxu0
      %v460 = vadd.f32 0.0, %v459
      %461 = vmatmul.f32.gmra.mxu0 %v391
      %v462 = vpop.f32.mrf.mxu0
      %v463 = vadd.f32 0.0, %v462
      %464 = vmatmul.f32.gmra.mxu0 %v392
      %v465 = vpop.f32.mrf.mxu0
      %v466 = vadd.f32 0.0, %v465
      %467 = vmatmul.f32.gmra.mxu0 %v393
      %v468 = vpop.f32.mrf.mxu0
      %v469 = vadd.f32 0.0, %v468
      %470 = vmatmul.f32.gmra.mxu0 %v394
      %v471 = vpop.f32.mrf.mxu0
      %v472 = vadd.f32 0.0, %v471
      %473 = vmatmul.f32.gmra.mxu0 %v395
      %v474 = vpop.f32.mrf.mxu0
      %v475 = vadd.f32 0.0, %v474
      %476 = vmatmul.f32.gmra.mxu0 %v396
      %v477 = vpop.f32.mrf.mxu0
      %v478 = vadd.f32 0.0, %v477
      %479 = vmatmul.f32.gmra.mxu0 %v397
      %v480 = vpop.f32.mrf.mxu0
      %v481 = vadd.f32 0.0, %v480
      %482 = vmatmul.f32.gmra.mxu0 %v398
      %v483 = vpop.f32.mrf.mxu0
      %v484 = vadd.f32 0.0, %v483
      %485 = vmatmul.f32.gmra.mxu0 %v399
      %v486 = vpop.f32.mrf.mxu0
      %v487 = vadd.f32 0.0, %v486
      %488 = vmatmul.f32.gmra.mxu0 %v400
      %v489 = vpop.f32.mrf.mxu0
      %v490 = vadd.f32 0.0, %v489
      %491 = vmatmul.f32.gmra.mxu0 %v401
      %v492 = vpop.f32.mrf.mxu0
      %v493 = vadd.f32 0.0, %v492
      %494 = vmatmul.f32.gmra.mxu0 %v402
      %v495 = vpop.f32.mrf.mxu0
      %v496 = vadd.f32 0.0, %v495
      %497 = vmatmul.f32.gmra.mxu0 %v403
      %v498 = vpop.f32.mrf.mxu0
      %v499 = vadd.f32 0.0, %v498
      %500 = vdwg.mxu0
      %501 = vmatpush.msra.mxu0 %v419
      %502 = vmatpush.msra.mxu0 %v418
      %503 = vmatpush.msra.mxu0 %v417
      %504 = vmatpush.msra.mxu0 %v416
      %505 = vmatpush.msra.mxu0 %v415
      %506 = vmatpush.msra.mxu0 %v414
      %507 = vmatpush.msra.mxu0 %v413
      %508 = vmatpush.msra.mxu0 %v412
      %509 = vmatpush.msra.mxu0 %v411
      %510 = vmatpush.msra.mxu0 %v410
      %511 = vmatpush.msra.mxu0 %v409
      %512 = vmatpush.msra.mxu0 %v408
      %513 = vmatpush.msra.mxu0 %v407
      %514 = vmatpush.msra.mxu0 %v406
      %515 = vmatpush.msra.mxu0 %v405
      %516 = vmatpush.msra.mxu0 %v404
      %517 = vmatmul.f32.gmra.mxu0 %v356
      %v518 = vpop.f32.mrf.mxu0
      %v519 = vadd.f32 %v454, %v518
      %520 = vmatmul.f32.gmra.mxu0 %v357
      %v521 = vpop.f32.mrf.mxu0
      %v522 = vadd.f32 %v457, %v521
      %523 = vmatmul.f32.gmra.mxu0 %v358
      %v524 = vpop.f32.mrf.mxu0
      %v525 = vadd.f32 %v460, %v524
      %526 = vmatmul.f32.gmra.mxu0 %v359
      %v527 = vpop.f32.mrf.mxu0
      %v528 = vadd.f32 %v463, %v527
      %529 = vmatmul.f32.gmra.mxu0 %v360
      %v530 = vpop.f32.mrf.mxu0
      %v531 = vadd.f32 %v466, %v530
      %532 = vmatmul.f32.gmra.mxu0 %v361
      %v533 = vpop.f32.mrf.mxu0
      %v534 = vadd.f32 %v469, %v533
      %535 = vmatmul.f32.gmra.mxu0 %v362
      %v536 = vpop.f32.mrf.mxu0
      %v537 = vadd.f32 %v472, %v536
      %538 = vmatmul.f32.gmra.mxu0 %v363
      %v539 = vpop.f32.mrf.mxu0
      %v540 = vadd.f32 %v475, %v539
      %541 = vmatmul.f32.gmra.mxu0 %v364
      %v542 = vpop.f32.mrf.mxu0
      %v543 = vadd.f32 %v478, %v542
      %544 = vmatmul.f32.gmra.mxu0 %v365
      %v545 = vpop.f32.mrf.mxu0
      %v546 = vadd.f32 %v481, %v545
      %547 = vmatmul.f32.gmra.mxu0 %v366
      %v548 = vpop.f32.mrf.mxu0
      %v549 = vadd.f32 %v484, %v548
      %550 = vmatmul.f32.gmra.mxu0 %v367
      %v551 = vpop.f32.mrf.mxu0
      %v552 = vadd.f32 %v487, %v551
      %553 = vmatmul.f32.gmra.mxu0 %v368
      %v554 = vpop.f32.mrf.mxu0
      %v555 = vadd.f32 %v490, %v554
      %556 = vmatmul.f32.gmra.mxu0 %v369
      %v557 = vpop.f32.mrf.mxu0
      %v558 = vadd.f32 %v493, %v557
      %559 = vmatmul.f32.gmra.mxu0 %v370
      %v560 = vpop.f32.mrf.mxu0
      %v561 = vadd.f32 %v496, %v560
      %562 = vmatmul.f32.gmra.mxu0 %v371
      %v563 = vpop.f32.mrf.mxu0
      %v564 = vadd.f32 %v499, %v563
      %565 = vdwg.mxu0
      %v566 = vld [vmem:[%s5] sm:$0x1]
      %v568 = vperm.slane %v566, 0
      %v570 = vadd.f32 %v519, %v568
      %v571 = vadd.f32 %v522, %v568
      %v572 = vadd.f32 %v525, %v568
      %v573 = vadd.f32 %v528, %v568
      %v574 = vadd.f32 %v531, %v568
      %v575 = vadd.f32 %v534, %v568
      %v576 = vadd.f32 %v537, %v568
      %v577 = vadd.f32 %v540, %v568
      %v578 = vadd.f32 %v543, %v568
      %v579 = vadd.f32 %v546, %v568
      %v580 = vadd.f32 %v549, %v568
      %v581 = vadd.f32 %v552, %v568
      %v582 = vadd.f32 %v555, %v568
      %v583 = vadd.f32 %v558, %v568
      %v584 = vadd.f32 %v561, %v568
      %v585 = vadd.f32 %v564, %v568
      %586 = vadd.xlane.f32.xlu0 %v570
      %v587 = vpop.xlane.xlu0 %586
      %588 = vadd.xlane.f32.xlu0 %v571
      %v589 = vpop.xlane.xlu0 %588
      %590 = vadd.xlane.f32.xlu0 %v572
      %v591 = vpop.xlane.xlu0 %590
      %592 = vadd.xlane.f32.xlu0 %v573
      %v593 = vpop.xlane.xlu0 %592
      %594 = vadd.xlane.f32.xlu0 %v574
      %v595 = vpop.xlane.xlu0 %594
      %596 = vadd.xlane.f32.xlu0 %v575
      %v597 = vpop.xlane.xlu0 %596
      %598 = vadd.xlane.f32.xlu0 %v576
      %v599 = vpop.xlane.xlu0 %598
      %600 = vadd.xlane.f32.xlu0 %v577
      %v601 = vpop.xlane.xlu0 %600
      %602 = vadd.xlane.f32.xlu0 %v578
      %v603 = vpop.xlane.xlu0 %602
      %604 = vadd.xlane.f32.xlu0 %v579
      %v605 = vpop.xlane.xlu0 %604
      %606 = vadd.xlane.f32.xlu0 %v580
      %v607 = vpop.xlane.xlu0 %606
      %608 = vadd.xlane.f32.xlu0 %v581
      %v609 = vpop.xlane.xlu0 %608
      %610 = vadd.xlane.f32.xlu0 %v582
      %v611 = vpop.xlane.xlu0 %610
      %612 = vadd.xlane.f32.xlu0 %v583
      %v613 = vpop.xlane.xlu0 %612
      %614 = vadd.xlane.f32.xlu0 %v584
      %v615 = vpop.xlane.xlu0 %614
      %616 = vadd.xlane.f32.xlu0 %v585
      %v617 = vpop.xlane.xlu0 %616
      %v618 = vmul.f32 %v587, 0.03125
      %v619 = vmul.f32 %v589, 0.03125
      %v620 = vmul.f32 %v591, 0.03125
      %v621 = vmul.f32 %v593, 0.03125
      %v622 = vmul.f32 %v595, 0.03125
      %v623 = vmul.f32 %v597, 0.03125
      %v624 = vmul.f32 %v599, 0.03125
      %v625 = vmul.f32 %v601, 0.03125
      %v626 = vmul.f32 %v603, 0.03125
      %v627 = vmul.f32 %v605, 0.03125
      %v628 = vmul.f32 %v607, 0.03125
      %v629 = vmul.f32 %v609, 0.03125
      %v630 = vmul.f32 %v611, 0.03125
      %v631 = vmul.f32 %v613, 0.03125
      %v632 = vmul.f32 %v615, 0.03125
      %v633 = vmul.f32 %v617, 0.03125
      %v634 = vmul.f32 %v570, %v570
      %v635 = vmul.f32 %v571, %v571
      %v636 = vmul.f32 %v572, %v572
      %v637 = vmul.f32 %v573, %v573
      %v638 = vmul.f32 %v574, %v574
      %v639 = vmul.f32 %v575, %v575
      %v640 = vmul.f32 %v576, %v576
      %v641 = vmul.f32 %v577, %v577
      %v642 = vmul.f32 %v578, %v578
      %v643 = vmul.f32 %v579, %v579
      %v644 = vmul.f32 %v580, %v580
      %v645 = vmul.f32 %v581, %v581
      %v646 = vmul.f32 %v582, %v582
      %v647 = vmul.f32 %v583, %v583
      %v648 = vmul.f32 %v584, %v584
      %v649 = vmul.f32 %v585, %v585
      %650 = vadd.xlane.f32.xlu0 %v634
      %v651 = vpop.xlane.xlu0 %650
      %652 = vadd.xlane.f32.xlu0 %v635
      %v653 = vpop.xlane.xlu0 %652
      %654 = vadd.xlane.f32.xlu0 %v636
      %v655 = vpop.xlane.xlu0 %654
      %656 = vadd.xlane.f32.xlu0 %v637
      %v657 = vpop.xlane.xlu0 %656
      %658 = vadd.xlane.f32.xlu0 %v638
      %v659 = vpop.xlane.xlu0 %658
      %660 = vadd.xlane.f32.xlu0 %v639
      %v661 = vpop.xlane.xlu0 %660
      %662 = vadd.xlane.f32.xlu0 %v640
      %v663 = vpop.xlane.xlu0 %662
      %664 = vadd.xlane.f32.xlu0 %v641
      %v665 = vpop.xlane.xlu0 %664
      %666 = vadd.xlane.f32.xlu0 %v642
      %v667 = vpop.xlane.xlu0 %666
      %668 = vadd.xlane.f32.xlu0 %v643
      %v669 = vpop.xlane.xlu0 %668
      %670 = vadd.xlane.f32.xlu0 %v644
      %v671 = vpop.xlane.xlu0 %670
      %672 = vadd.xlane.f32.xlu0 %v645
      %v673 = vpop.xlane.xlu0 %672
      %674 = vadd.xlane.f32.xlu0 %v646
      %v675 = vpop.xlane.xlu0 %674
      %676 = vadd.xlane.f32.xlu0 %v647
      %v677 = vpop.xlane.xlu0 %676
      %678 = vadd.xlane.f32.xlu0 %v648
      %v679 = vpop.xlane.xlu0 %678
      %680 = vadd.xlane.f32.xlu0 %v649
      %v681 = vpop.xlane.xlu0 %680
      %v682 = vmul.f32 %v651, 0.03125
      %v683 = vmul.f32 %v653, 0.03125
      %v684 = vmul.f32 %v655, 0.03125
      %v685 = vmul.f32 %v657, 0.03125
      %v686 = vmul.f32 %v659, 0.03125
      %v687 = vmul.f32 %v661, 0.03125
      %v688 = vmul.f32 %v663, 0.03125
      %v689 = vmul.f32 %v665, 0.03125
      %v690 = vmul.f32 %v667, 0.03125
      %v691 = vmul.f32 %v669, 0.03125
      %v692 = vmul.f32 %v671, 0.03125
      %v693 = vmul.f32 %v673, 0.03125
      %v694 = vmul.f32 %v675, 0.03125
      %v695 = vmul.f32 %v677, 0.03125
      %v696 = vmul.f32 %v679, 0.03125
      %v697 = vmul.f32 %v681, 0.03125
      %v698 = vmul.f32 %v618, %v618
      %v699 = vmul.f32 %v619, %v619
      %v700 = vmul.f32 %v620, %v620
      %v701 = vmul.f32 %v621, %v621
      %v702 = vmul.f32 %v622, %v622
      %v703 = vmul.f32 %v623, %v623
      %v704 = vmul.f32 %v624, %v624
      %v705 = vmul.f32 %v625, %v625
      %v706 = vmul.f32 %v626, %v626
      %v707 = vmul.f32 %v627, %v627
      %v708 = vmul.f32 %v628, %v628
      %v709 = vmul.f32 %v629, %v629
      %v710 = vmul.f32 %v630, %v630
      %v711 = vmul.f32 %v631, %v631
      %v712 = vmul.f32 %v632, %v632
      %v713 = vmul.f32 %v633, %v633
      %v714 = vsub.f32 %v682, %v698
      %v715 = vsub.f32 %v683, %v699
      %v716 = vsub.f32 %v684, %v700
      %v717 = vsub.f32 %v685, %v701
      %v718 = vsub.f32 %v686, %v702
      %v719 = vsub.f32 %v687, %v703
      %v720 = vsub.f32 %v688, %v704
      %v721 = vsub.f32 %v689, %v705
      %v722 = vsub.f32 %v690, %v706
      %v723 = vsub.f32 %v691, %v707
      %v724 = vsub.f32 %v692, %v708
      %v725 = vsub.f32 %v693, %v709
      %v726 = vsub.f32 %v694, %v710
      %v727 = vsub.f32 %v695, %v711
      %v728 = vsub.f32 %v696, %v712
      %v729 = vsub.f32 %v697, %v713
      %v730 = vsub.f32 %v570, %v618
      %v731 = vsub.f32 %v571, %v619
      %v732 = vsub.f32 %v572, %v620
      %v733 = vsub.f32 %v573, %v621
      %v734 = vsub.f32 %v574, %v622
      %v735 = vsub.f32 %v575, %v623
      %v736 = vsub.f32 %v576, %v624
      %v737 = vsub.f32 %v577, %v625
      %v738 = vsub.f32 %v578, %v626
      %v739 = vsub.f32 %v579, %v627
      %v740 = vsub.f32 %v580, %v628
      %v741 = vsub.f32 %v581, %v629
      %v742 = vsub.f32 %v582, %v630
      %v743 = vsub.f32 %v583, %v631
      %v744 = vsub.f32 %v584, %v632
      %v745 = vsub.f32 %v585, %v633
      %v746 = vadd.f32 %v714, 1e-05
      %v747 = vadd.f32 %v715, 1e-05
      %v748 = vadd.f32 %v716, 1e-05
      %v749 = vadd.f32 %v717, 1e-05
      %v750 = vadd.f32 %v718, 1e-05
      %v751 = vadd.f32 %v719, 1e-05
      %v752 = vadd.f32 %v720, 1e-05
      %v753 = vadd.f32 %v721, 1e-05
      %v754 = vadd.f32 %v722, 1e-05
      %v755 = vadd.f32 %v723, 1e-05
      %v756 = vadd.f32 %v724, 1e-05
      %v757 = vadd.f32 %v725, 1e-05
      %v758 = vadd.f32 %v726, 1e-05
      %v759 = vadd.f32 %v727, 1e-05
      %v760 = vadd.f32 %v728, 1e-05
      %v761 = vadd.f32 %v729, 1e-05
      %v762 = vrsqrt.pop %v746
      %v763 = vmul.f32 %v762, %v746
      %v764 = vmul.f32 %v763, %v762
      %v765 = vmul.f32 0.5, %v764
      %v766 = vsub.f32 1.5, %v765
      %v767 = vmul.f32 %v762, %v766
      %vm768 = vweird.f32 %v746
      %vm769 = vweird.f32 %v762
      %vm770 = vmor %vm768, %vm769
      %v771 = vsel %vm770, %v762, %v767
      %v772 = vrsqrt.pop %v747
      %v773 = vmul.f32 %v772, %v747
      %v774 = vmul.f32 %v773, %v772
      %v775 = vmul.f32 0.5, %v774
      %v776 = vsub.f32 1.5, %v775
      %v777 = vmul.f32 %v772, %v776
      %vm778 = vweird.f32 %v747
      %vm779 = vweird.f32 %v772
      %vm780 = vmor %vm778, %vm779
      %v781 = vsel %vm780, %v772, %v777
      %v782 = vrsqrt.pop %v748
      %v783 = vmul.f32 %v782, %v748
      %v784 = vmul.f32 %v783, %v782
      %v785 = vmul.f32 0.5, %v784
      %v786 = vsub.f32 1.5, %v785
      %v787 = vmul.f32 %v782, %v786
      %vm788 = vweird.f32 %v748
      %vm789 = vweird.f32 %v782
      %vm790 = vmor %vm788, %vm789
      %v791 = vsel %vm790, %v782, %v787
      %v792 = vrsqrt.pop %v749
      %v793 = vmul.f32 %v792, %v749
      %v794 = vmul.f32 %v793, %v792
      %v795 = vmul.f32 0.5, %v794
      %v796 = vsub.f32 1.5, %v795
      %v797 = vmul.f32 %v792, %v796
      %vm798 = vweird.f32 %v749
      %vm799 = vweird.f32 %v792
      %vm800 = vmor %vm798, %vm799
      %v801 = vsel %vm800, %v792, %v797
      %v802 = vrsqrt.pop %v750
      %v803 = vmul.f32 %v802, %v750
      %v804 = vmul.f32 %v803, %v802
      %v805 = vmul.f32 0.5, %v804
      %v806 = vsub.f32 1.5, %v805
      %v807 = vmul.f32 %v802, %v806
      %vm808 = vweird.f32 %v750
      %vm809 = vweird.f32 %v802
      %vm810 = vmor %vm808, %vm809
      %v811 = vsel %vm810, %v802, %v807
      %v812 = vrsqrt.pop %v751
      %v813 = vmul.f32 %v812, %v751
      %v814 = vmul.f32 %v813, %v812
      %v815 = vmul.f32 0.5, %v814
      %v816 = vsub.f32 1.5, %v815
      %v817 = vmul.f32 %v812, %v816
      %vm818 = vweird.f32 %v751
      %vm819 = vweird.f32 %v812
      %vm820 = vmor %vm818, %vm819
      %v821 = vsel %vm820, %v812, %v817
      %v822 = vrsqrt.pop %v752
      %v823 = vmul.f32 %v822, %v752
      %v824 = vmul.f32 %v823, %v822
      %v825 = vmul.f32 0.5, %v824
      %v826 = vsub.f32 1.5, %v825
      %v827 = vmul.f32 %v822, %v826
      %vm828 = vweird.f32 %v752
      %vm829 = vweird.f32 %v822
      %vm830 = vmor %vm828, %vm829
      %v831 = vsel %vm830, %v822, %v827
      %v832 = vrsqrt.pop %v753
      %v833 = vmul.f32 %v832, %v753
      %v834 = vmul.f32 %v833, %v832
      %v835 = vmul.f32 0.5, %v834
      %v836 = vsub.f32 1.5, %v835
      %v837 = vmul.f32 %v832, %v836
      %vm838 = vweird.f32 %v753
      %vm839 = vweird.f32 %v832
      %vm840 = vmor %vm838, %vm839
      %v841 = vsel %vm840, %v832, %v837
      %v842 = vrsqrt.pop %v754
      %v843 = vmul.f32 %v842, %v754
      %v844 = vmul.f32 %v843, %v842
      %v845 = vmul.f32 0.5, %v844
      %v846 = vsub.f32 1.5, %v845
      %v847 = vmul.f32 %v842, %v846
      %vm848 = vweird.f32 %v754
      %vm849 = vweird.f32 %v842
      %vm850 = vmor %vm848, %vm849
      %v851 = vsel %vm850, %v842, %v847
      %v852 = vrsqrt.pop %v755
      %v853 = vmul.f32 %v852, %v755
      %v854 = vmul.f32 %v853, %v852
      %v855 = vmul.f32 0.5, %v854
      %v856 = vsub.f32 1.5, %v855
      %v857 = vmul.f32 %v852, %v856
      %vm858 = vweird.f32 %v755
      %vm859 = vweird.f32 %v852
      %vm860 = vmor %vm858, %vm859
      %v861 = vsel %vm860, %v852, %v857
      %v862 = vrsqrt.pop %v756
      %v863 = vmul.f32 %v862, %v756
      %v864 = vmul.f32 %v863, %v862
      %v865 = vmul.f32 0.5, %v864
      %v866 = vsub.f32 1.5, %v865
      %v867 = vmul.f32 %v862, %v866
      %vm868 = vweird.f32 %v756
      %vm869 = vweird.f32 %v862
      %vm870 = vmor %vm868, %vm869
      %v871 = vsel %vm870, %v862, %v867
      %v872 = vrsqrt.pop %v757
      %v873 = vmul.f32 %v872, %v757
      %v874 = vmul.f32 %v873, %v872
      %v875 = vmul.f32 0.5, %v874
      %v876 = vsub.f32 1.5, %v875
      %v877 = vmul.f32 %v872, %v876
      %vm878 = vweird.f32 %v757
      %vm879 = vweird.f32 %v872
      %vm880 = vmor %vm878, %vm879
      %v881 = vsel %vm880, %v872, %v877
      %v882 = vrsqrt.pop %v758
      %v883 = vmul.f32 %v882, %v758
      %v884 = vmul.f32 %v883, %v882
      %v885 = vmul.f32 0.5, %v884
      %v886 = vsub.f32 1.5, %v885
      %v887 = vmul.f32 %v882, %v886
      %vm888 = vweird.f32 %v758
      %vm889 = vweird.f32 %v882
      %vm890 = vmor %vm888, %vm889
      %v891 = vsel %vm890, %v882, %v887
      %v892 = vrsqrt.pop %v759
      %v893 = vmul.f32 %v892, %v759
      %v894 = vmul.f32 %v893, %v892
      %v895 = vmul.f32 0.5, %v894
      %v896 = vsub.f32 1.5, %v895
      %v897 = vmul.f32 %v892, %v896
      %vm898 = vweird.f32 %v759
      %vm899 = vweird.f32 %v892
      %vm900 = vmor %vm898, %vm899
      %v901 = vsel %vm900, %v892, %v897
      %v902 = vrsqrt.pop %v760
      %v903 = vmul.f32 %v902, %v760
      %v904 = vmul.f32 %v903, %v902
      %v905 = vmul.f32 0.5, %v904
      %v906 = vsub.f32 1.5, %v905
      %v907 = vmul.f32 %v902, %v906
      %vm908 = vweird.f32 %v760
      %vm909 = vweird.f32 %v902
      %vm910 = vmor %vm908, %vm909
      %v911 = vsel %vm910, %v902, %v907
      %v912 = vrsqrt.pop %v761
      %v913 = vmul.f32 %v912, %v761
      %v914 = vmul.f32 %v913, %v912
      %v915 = vmul.f32 0.5, %v914
      %v916 = vsub.f32 1.5, %v915
      %v917 = vmul.f32 %v912, %v916
      %vm918 = vweird.f32 %v761
      %vm919 = vweird.f32 %v912
      %vm920 = vmor %vm918, %vm919
      %v921 = vsel %vm920, %v912, %v917
      %v922 = vmul.f32 %v730, %v771
      %v923 = vmul.f32 %v731, %v781
      %v924 = vmul.f32 %v732, %v791
      %v925 = vmul.f32 %v733, %v801
      %v926 = vmul.f32 %v734, %v811
      %v927 = vmul.f32 %v735, %v821
      %v928 = vmul.f32 %v736, %v831
      %v929 = vmul.f32 %v737, %v841
      %v930 = vmul.f32 %v738, %v851
      %v931 = vmul.f32 %v739, %v861
      %v932 = vmul.f32 %v740, %v871
      %v933 = vmul.f32 %v741, %v881
      %v934 = vmul.f32 %v742, %v891
      %v935 = vmul.f32 %v743, %v901
      %v936 = vmul.f32 %v744, %v911
      %v937 = vmul.f32 %v745, %v921
      %v938 = vld [vmem:[%s6] sm:$0x1]
      %v940 = vperm.slane %v938, 0
      %v942 = vmul.f32 %v922, %v940
      %v943 = vmul.f32 %v923, %v940
      %v944 = vmul.f32 %v924, %v940
      %v945 = vmul.f32 %v925, %v940
      %v946 = vmul.f32 %v926, %v940
      %v947 = vmul.f32 %v927, %v940
      %v948 = vmul.f32 %v928, %v940
      %v949 = vmul.f32 %v929, %v940
      %v950 = vmul.f32 %v930, %v940
      %v951 = vmul.f32 %v931, %v940
      %v952 = vmul.f32 %v932, %v940
      %v953 = vmul.f32 %v933, %v940
      %v954 = vmul.f32 %v934, %v940
      %v955 = vmul.f32 %v935, %v940
      %v956 = vmul.f32 %v936, %v940
      %v957 = vmul.f32 %v937, %v940
      %v958 = vld [vmem:[%s7] sm:$0x1]
      %v960 = vperm.slane %v958, 0
      %v962 = vadd.f32 %v942, %v960
      %v963 = vadd.f32 %v943, %v960
      %v964 = vadd.f32 %v944, %v960
      %v965 = vadd.f32 %v945, %v960
      %v966 = vadd.f32 %v946, %v960
      %v967 = vadd.f32 %v947, %v960
      %v968 = vadd.f32 %v948, %v960
      %v969 = vadd.f32 %v949, %v960
      %v970 = vadd.f32 %v950, %v960
      %v971 = vadd.f32 %v951, %v960
      %v972 = vadd.f32 %v952, %v960
      %v973 = vadd.f32 %v953, %v960
      %v974 = vadd.f32 %v954, %v960
      %v975 = vadd.f32 %v955, %v960
      %v976 = vadd.f32 %v956, %v960
      %v977 = vadd.f32 %v957, %v960
      %v978 = vmax.f32 %v962, 0.0
      %v979 = vmax.f32 %v963, 0.0
      %v980 = vmax.f32 %v964, 0.0
      %v981 = vmax.f32 %v965, 0.0
      %v982 = vmax.f32 %v966, 0.0
      %v983 = vmax.f32 %v967, 0.0
      %v984 = vmax.f32 %v968, 0.0
      %v985 = vmax.f32 %v969, 0.0
      %v986 = vmax.f32 %v970, 0.0
      %v987 = vmax.f32 %v971, 0.0
      %v988 = vmax.f32 %v972, 0.0
      %v989 = vmax.f32 %v973, 0.0
      %v990 = vmax.f32 %v974, 0.0
      %v991 = vmax.f32 %v975, 0.0
      %v992 = vmax.f32 %v976, 0.0
      %v993 = vmax.f32 %v977, 0.0
      %v994 = vpack.c.bf16 %v978, %v978
      %v995 = vpack.c.bf16 %v979, %v979
      %v996 = vpack.c.bf16 %v980, %v980
      %v997 = vpack.c.bf16 %v981, %v981
      %v998 = vpack.c.bf16 %v982, %v982
      %v999 = vpack.c.bf16 %v983, %v983
      %v1000 = vpack.c.bf16 %v984, %v984
      %v1001 = vpack.c.bf16 %v985, %v985
      %v1002 = vpack.c.bf16 %v986, %v986
      %v1003 = vpack.c.bf16 %v987, %v987
      %v1004 = vpack.c.bf16 %v988, %v988
      %v1005 = vpack.c.bf16 %v989, %v989
      %v1006 = vpack.c.bf16 %v990, %v990
      %v1007 = vpack.c.bf16 %v991, %v991
      %v1008 = vpack.c.bf16 %v992, %v992
      %v1009 = vpack.c.bf16 %v993, %v993
      %1010 = vst [vmem:[#allocation12] sm:$0xf] %v994
      %1011 = vst [vmem:[#allocation12 + $0x4] sm:$0xf] %v995
      %1012 = vst [vmem:[#allocation12 + $0x8] sm:$0xf] %v996
      %1013 = vst [vmem:[#allocation12 + $0xc] sm:$0xf] %v997
      %1014 = vst [vmem:[#allocation12 + $0x10] sm:$0xf] %v998
      %1015 = vst [vmem:[#allocation12 + $0x14] sm:$0xf] %v999
      %1016 = vst [vmem:[#allocation12 + $0x18] sm:$0xf] %v1000
      %1017 = vst [vmem:[#allocation12 + $0x1c] sm:$0xf] %v1001
      %1018 = vst [vmem:[#allocation12 + $0x20] sm:$0xf] %v1002
      %1019 = vst [vmem:[#allocation12 + $0x24] sm:$0xf] %v1003
      %1020 = vst [vmem:[#allocation12 + $0x28] sm:$0xf] %v1004
      %1021 = vst [vmem:[#allocation12 + $0x2c] sm:$0xf] %v1005
      %1022 = vst [vmem:[#allocation12 + $0x30] sm:$0xf] %v1006
      %1023 = vst [vmem:[#allocation12 + $0x34] sm:$0xf] %v1007
      %1024 = vst [vmem:[#allocation12 + $0x38] sm:$0xf] %v1008
      %1025 = vst [vmem:[#allocation12 + $0x3c] sm:$0xf] %v1009
    $region61: #{tpu_custom_call.1} parent=1 // pred_fallthru
      _
    // Predicated region
    $region62: #{tpu_custom_call.1} parent=1 // pred_check
      _
    $region63: #{tpu_custom_call.1} parent=1 // pred_check_branch
      %1027 = sbr.rel (0) target = $region65
    $region64: #{tpu_custom_call.1} parent=1 // pred_region
      %1029 = vsyncadd [#allocation5], 0
      %s1030 = sshll.u32 [#allocation12], 4
      %s1031 = int_to_ptr.vmem [resolvable:$true] %s1030
      %s1032 = sshll.u32 %s8, 4
      %s1033 = int_to_ptr.hbm [resolvable:$true] %s1032
      %1038 = dma.vmem_to_hbm [thread:$0]  %s1031, 1024, %s1033, [#allocation5], 64, 64, 4
    $region65: #{tpu_custom_call.1} parent=1 // pred_fallthru
      _
    // Predicated region
    $region66: #{tpu_custom_call.1} parent=1 // pred_check
      _
    $region67: #{tpu_custom_call.1} parent=1 // pred_check_branch
      %1040 = sbr.rel (0) target = $region69
    $region68: #{tpu_custom_call.1} parent=1 // pred_region
      %1042 = dma.done [#allocation5], 1024
    $region69: #{tpu_custom_call.1} parent=1 // pred_fallthru
      _
    %1043 = vsyncpa [#allocation4], 1
    %1044 = vsyncpa [#allocation7], 1
    %1045 = vsyncpa [#allocation10], 1
    %1046 = vsyncpa [#allocation5], 1

</llo_original>
